<compile_context>
chip_gen: v7x
topology: tpu7x:2x2x1
jax: 0.10.0
libtpu: 0.0.40
codegen_flags: <defaults>
</compile_context>

<pallas_src>
import functools

import jax
import jax.numpy as jnp
from jax import lax
from jax.experimental import pallas as pl
from jax.experimental.pallas import tpu as pltpu

D_IN, D_H1, D_H2, D_OUT = 3, 16, 8, 1
CHUNK = 128            # one vreg of lanes; every per-chunk operand is an exact (., 128) tile
_UNROLL = 4            # 128-lane columns processed per inner-loop iteration (when divisible)

# Packed, lane-replicated parameter buffer (f32, shape (_P_ROWS, CHUNK)):
#   rows [  0,  48): W1 columns, row 16*k + j = W1[j, k]
#   rows [ 48,  64): b1
#   rows [ 64, 192): W2 columns, row  8*k + j = W2[j, k]
#   rows [192, 200): b2
#   rows [200, 208): W3 columns, row k       = W3[0, k]
#   row   208      : b3
_W1_OFF = 0
_B1_OFF = _W1_OFF + D_IN * D_H1      # 48
_W2_OFF = _B1_OFF + D_H1             # 64
_B2_OFF = _W2_OFF + D_H1 * D_H2      # 192
_W3_OFF = _B2_OFF + D_H2             # 200
_B3_OFF = _W3_OFF + D_H2             # 208
_P_ROWS = _B3_OFF + D_OUT            # 209


def _row_bcast(ref, row, nrows, lane_idx):
    """Load one row of `ref` and broadcast it across `nrows` sublanes -> (nrows, CHUNK)."""
    r = ref[row:row + 1, lane_idx]                      # (1, CHUNK): cheap single-row load
    return jnp.broadcast_to(r, (nrows, CHUNK))


def qos_mlp_kernel(x_ref, p_ref, o_ref, h1_scr, h2_scr):
    """x_ref: (3, TB) batch-on-lanes; p_ref: (209, 128) lane-replicated params;
    o_ref: (1, TB); h1_scr: (16, 128) / h2_scr: (8, 128) VMEM staging scratch."""
    # Weight operands: loaded once per grid step, already lane-replicated -> no splats
    # inside the MAC loops (hoisted above all k-loops per review).
    w1c = [p_ref[_W1_OFF + D_H1 * k:_W1_OFF + D_H1 * (k + 1), :] for k in range(D_IN)]
    b1 = p_ref[_B1_OFF:_B1_OFF + D_H1, :]
    w2c = [p_ref[_W2_OFF + D_H2 * k:_W2_OFF + D_H2 * (k + 1), :] for k in range(D_H1)]
    b2 = p_ref[_B2_OFF:_B2_OFF + D_H2, :]
    w3c = [p_ref[_W3_OFF + k:_W3_OFF + k + 1, :] for k in range(D_H2)]
    b3 = p_ref[_B3_OFF:_B3_OFF + D_OUT, :]

    tile_b = x_ref.shape[1]
    n_chunks = tile_b // CHUNK
    unroll = _UNROLL if n_chunks % _UNROLL == 0 else 1

    def one_chunk(off):
        lanes = pl.ds(off, CHUNK)

        # ---- Linear(3, 16) + ReLU : unrolled VPU MACs (K=3; MXU would be <1% utilized) ----
        h1 = b1
        for k in range(D_IN):
            h1 = h1 + w1c[k] * _row_bcast(x_ref, k, D_H1, lanes)
        h1 = jnp.maximum(h1, 0.0)

        # Dropout(0.2): inference mode == identity.
        # TODO(synk): training-mode dropout would use pltpu.prng_seed / prng_random_bits
        #             to build a Bernoulli keep-mask and scale by 1/(1-p).

        # Stage h1 so layer-2 sublane broadcasts come from fresh 1-row loads (vld slack),
        # not sublane extracts of a live vector value (XLU pressure).
        h1_scr[...] = h1

        # ---- Linear(16, 8) + ReLU ----
        h2 = b2
        for k in range(D_H1):
            h2 = h2 + w2c[k] * _row_bcast(h1_scr, k, D_H2, slice(None))
        h2 = jnp.maximum(h2, 0.0)
        h2_scr[...] = h2

        # ---- Linear(8, 1) ----
        out = b3
        for k in range(D_H2):
            out = out + w3c[k] * h2_scr[k:k + 1, :]     # (1, 128), no broadcast needed

        o_ref[:, lanes] = out                           # lane-dense, 128-aligned store

    def body(i, carry):
        base = pl.multiple_of(i * (unroll * CHUNK), unroll * CHUNK)
        for u in range(unroll):
            one_chunk(pl.multiple_of(base + u * CHUNK, CHUNK))
        return carry

    lax.fori_loop(0, n_chunks // unroll, body, 0)


def _choose_tile_b(batch, tb):
    """Lane-tile choice: big enough to amortize the ~0.35us/step grid overhead, a multiple
    of 128 (and of the inner unroll when possible), and capped so the grid keeps >= 4
    steps for v7x's two TensorCores."""
    if tb is None:
        tb = 16384
    tb = max(CHUNK, (tb // CHUNK) * CHUNK)
    lane_b = pl.cdiv(batch, CHUNK) * CHUNK
    tile = min(tb, lane_b)
    if lane_b >= 4 * CHUNK:
        cap = pl.cdiv(pl.cdiv(batch, 4), CHUNK) * CHUNK     # >= 4 grid steps
        tile = min(tile, max(cap, CHUNK))
    if tile >= _UNROLL * CHUNK:
        tile = (tile // (_UNROLL * CHUNK)) * (_UNROLL * CHUNK)
    return tile


@functools.partial(jax.jit, static_argnames=("tb",))
def qos_model_forward(x_fm, packed_params, *, tb=None):
    """Features-major forward: x_fm (3, B) f32 -> (1, B) f32. No wrapper transpose/pad/slice."""
    batch = x_fm.shape[1]
    tile_b = _choose_tile_b(batch, tb)
    return pl.pallas_call(
        qos_mlp_kernel,
        out_shape=jax.ShapeDtypeStruct((D_OUT, batch), jnp.float32),
        grid=(pl.cdiv(batch, tile_b),),                 # partial last block: Pallas masks OOB
        in_specs=[
            pl.BlockSpec((D_IN, tile_b), lambda i: (0, i)),        # batch-tiled input
            pl.BlockSpec((_P_ROWS, CHUNK), lambda i: (0, 0)),      # params: one DMA, resident
        ],
        out_specs=pl.BlockSpec((D_OUT, tile_b), lambda i: (0, i)),  # lane-dense output
        scratch_shapes=[
            pltpu.VMEM((D_H1, CHUNK), jnp.float32),     # h1 staging for row re-reads
            pltpu.VMEM((D_H2, CHUNK), jnp.float32),     # h2 staging
        ],
        compiler_params=pltpu.CompilerParams(
            dimension_semantics=("parallel",),          # independent batch tiles (megacore)
            vmem_limit_bytes=32 * 1024 * 1024,          # explicit; > v5e's 16 MiB default
        ),
    )(x_fm.astype(jnp.float32), packed_params)


def qos_model_forward_rows(x_rows, packed_params, *, tb=None):
    """Torch-layout convenience: (B, 3) -> (B, 1). The two transposes here are whole extra
    HBM round trips; keep activations features-major upstream and use qos_model_forward."""
    return qos_model_forward(x_rows.T, packed_params, tb=tb).T


def pack_params(params):
    """Pack torch-oriented params (W: (out, in), b: (out,)) into the lane-replicated buffer."""
    vec = jnp.concatenate([
        params["w1"].T.reshape(-1),      # row 16*k + j = W1[j, k]
        params["b1"].reshape(-1),
        params["w2"].T.reshape(-1),      # row  8*k + j = W2[j, k]
        params["b2"].reshape(-1),
        params["w3"].T.reshape(-1),      # row k = W3[0, k]
        params["b3"].reshape(-1),
    ]).astype(jnp.float32)
    assert vec.shape[0] == _P_ROWS
    return jnp.tile(vec[:, None], (1, CHUNK))


def init_params(key):
    """Torch-shaped params: W is (out, in), b is (out,). Kaiming-uniform-ish init."""
    ks = jax.random.split(key, 6)

    def linear_init(kw, kb, fan_in, fan_out):
        bound = float(fan_in) ** -0.5
        w = jax.random.uniform(kw, (fan_out, fan_in), jnp.float32, -bound, bound)
        b = jax.random.uniform(kb, (fan_out,), jnp.float32, -bound, bound)
        return w, b

    w1, b1 = linear_init(ks[0], ks[1], D_IN, D_H1)
    w2, b2 = linear_init(ks[2], ks[3], D_H1, D_H2)
    w3, b3 = linear_init(ks[4], ks[5], D_H2, D_OUT)
    return {"w1": w1, "b1": b1, "w2": w2, "b2": b2, "w3": w3, "b3": b3}


def reference_forward(x, p):
    """Pure-JAX reference with torch semantics: x (B, 3) -> (B, 1)."""
    dot = lambda a, b: jnp.dot(a, b, precision=lax.Precision.HIGHEST)
    h1 = jnp.maximum(dot(x, p["w1"].T) + p["b1"], 0.0)
    h2 = jnp.maximum(dot(h1, p["w2"].T) + p["b2"], 0.0)
    return dot(h2, p["w3"].T) + p["b3"]


if __name__ == "__main__":
    key = jax.random.PRNGKey(0)
    k_x, k_p = jax.random.split(key)

    # Small batch; 500 is not a multiple of 128, so the partial-final-block masking and
    # the multi-step (4-step) grid path are both exercised.
    batch = 500
    x_fm = jax.random.normal(k_x, (D_IN, batch), dtype=jnp.float32)   # features-major (3, B)
    params = init_params(k_p)
    packed = pack_params(params)

    out = qos_model_forward(x_fm, packed)
    out = jax.block_until_ready(out)

    ref = reference_forward(x_fm.T, params)          # (B, 1) torch-semantics reference
    assert out.shape == (D_OUT, batch)
    assert jnp.allclose(out.T, ref, atol=1e-5, rtol=1e-5), "mismatch vs reference"

    print("KERNEL_OK")
</pallas_src>

<mosaic_0001>
module attributes {stable_mosaic.version = 11 : i64} {
  func.func @qos_mlp_kernel(%arg0: i32, %arg1: memref<3x128xf32, #tpu.memory_space<vmem>>, %arg2: memref<209x128xf32, #tpu.memory_space<vmem>>, %arg3: memref<1x128xf32, #tpu.memory_space<vmem>>, %arg4: memref<16x128xf32, #tpu.memory_space<vmem>>, %arg5: memref<8x128xf32, #tpu.memory_space<vmem>>) attributes {dimension_semantics = [#tpu.dimension_semantics<parallel>], iteration_bounds = array<i64: 4>, scalar_prefetch = 0 : i64, scratch_operands = 2 : i64, tpu.core_type = #tpu.core_type<tc>, window_params = [{transform_indices = @transform_0, window_bounds = array<i64: 3, 128>}, {pipeline_mode = #tpu.pipeline_mode<synchronous>, transform_indices = @transform_1, window_bounds = array<i64: 209, 128>}, {transform_indices = @transform_2, window_bounds = array<i64: 1, 128>}]} {
    %c0 = arith.constant 0 : index
    %c0_0 = arith.constant 0 : index
    %0 = vector.load %arg2[%c0, %c0_0] : memref<209x128xf32, #tpu.memory_space<vmem>>, vector<16x128xf32>
    %c16 = arith.constant 16 : index
    %c0_1 = arith.constant 0 : index
    %1 = vector.load %arg2[%c16, %c0_1] : memref<209x128xf32, #tpu.memory_space<vmem>>, vector<16x128xf32>
    %c32 = arith.constant 32 : index
    %c0_2 = arith.constant 0 : index
    %2 = vector.load %arg2[%c32, %c0_2] : memref<209x128xf32, #tpu.memory_space<vmem>>, vector<16x128xf32>
    %c48 = arith.constant 48 : index
    %c0_3 = arith.constant 0 : index
    %3 = vector.load %arg2[%c48, %c0_3] : memref<209x128xf32, #tpu.memory_space<vmem>>, vector<16x128xf32>
    %c64 = arith.constant 64 : index
    %c0_4 = arith.constant 0 : index
    %4 = vector.load %arg2[%c64, %c0_4] : memref<209x128xf32, #tpu.memory_space<vmem>>, vector<8x128xf32>
    %c72 = arith.constant 72 : index
    %c0_5 = arith.constant 0 : index
    %5 = vector.load %arg2[%c72, %c0_5] : memref<209x128xf32, #tpu.memory_space<vmem>>, vector<8x128xf32>
    %c80 = arith.constant 80 : index
    %c0_6 = arith.constant 0 : index
    %6 = vector.load %arg2[%c80, %c0_6] : memref<209x128xf32, #tpu.memory_space<vmem>>, vector<8x128xf32>
    %c88 = arith.constant 88 : index
    %c0_7 = arith.constant 0 : index
    %7 = vector.load %arg2[%c88, %c0_7] : memref<209x128xf32, #tpu.memory_space<vmem>>, vector<8x128xf32>
    %c96 = arith.constant 96 : index
    %c0_8 = arith.constant 0 : index
    %8 = vector.load %arg2[%c96, %c0_8] : memref<209x128xf32, #tpu.memory_space<vmem>>, vector<8x128xf32>
    %c104 = arith.constant 104 : index
    %c0_9 = arith.constant 0 : index
    %9 = vector.load %arg2[%c104, %c0_9] : memref<209x128xf32, #tpu.memory_space<vmem>>, vector<8x128xf32>
    %c112 = arith.constant 112 : index
    %c0_10 = arith.constant 0 : index
    %10 = vector.load %arg2[%c112, %c0_10] : memref<209x128xf32, #tpu.memory_space<vmem>>, vector<8x128xf32>
    %c120 = arith.constant 120 : index
    %c0_11 = arith.constant 0 : index
    %11 = vector.load %arg2[%c120, %c0_11] : memref<209x128xf32, #tpu.memory_space<vmem>>, vector<8x128xf32>
    %c128 = arith.constant 128 : index
    %c0_12 = arith.constant 0 : index
    %12 = vector.load %arg2[%c128, %c0_12] : memref<209x128xf32, #tpu.memory_space<vmem>>, vector<8x128xf32>
    %c136 = arith.constant 136 : index
    %c0_13 = arith.constant 0 : index
    %13 = vector.load %arg2[%c136, %c0_13] : memref<209x128xf32, #tpu.memory_space<vmem>>, vector<8x128xf32>
    %c144 = arith.constant 144 : index
    %c0_14 = arith.constant 0 : index
    %14 = vector.load %arg2[%c144, %c0_14] : memref<209x128xf32, #tpu.memory_space<vmem>>, vector<8x128xf32>
    %c152 = arith.constant 152 : index
    %c0_15 = arith.constant 0 : index
    %15 = vector.load %arg2[%c152, %c0_15] : memref<209x128xf32, #tpu.memory_space<vmem>>, vector<8x128xf32>
    %c160 = arith.constant 160 : index
    %c0_16 = arith.constant 0 : index
    %16 = vector.load %arg2[%c160, %c0_16] : memref<209x128xf32, #tpu.memory_space<vmem>>, vector<8x128xf32>
    %c168 = arith.constant 168 : index
    %c0_17 = arith.constant 0 : index
    %17 = vector.load %arg2[%c168, %c0_17] : memref<209x128xf32, #tpu.memory_space<vmem>>, vector<8x128xf32>
    %c176 = arith.constant 176 : index
    %c0_18 = arith.constant 0 : index
    %18 = vector.load %arg2[%c176, %c0_18] : memref<209x128xf32, #tpu.memory_space<vmem>>, vector<8x128xf32>
    %c184 = arith.constant 184 : index
    %c0_19 = arith.constant 0 : index
    %19 = vector.load %arg2[%c184, %c0_19] : memref<209x128xf32, #tpu.memory_space<vmem>>, vector<8x128xf32>
    %c192 = arith.constant 192 : index
    %c0_20 = arith.constant 0 : index
    %20 = vector.load %arg2[%c192, %c0_20] : memref<209x128xf32, #tpu.memory_space<vmem>>, vector<8x128xf32>
    %c200 = arith.constant 200 : index
    %c0_21 = arith.constant 0 : index
    %21 = vector.load %arg2[%c200, %c0_21] : memref<209x128xf32, #tpu.memory_space<vmem>>, vector<1x128xf32>
    %c201 = arith.constant 201 : index
    %c0_22 = arith.constant 0 : index
    %22 = vector.load %arg2[%c201, %c0_22] : memref<209x128xf32, #tpu.memory_space<vmem>>, vector<1x128xf32>
    %c202 = arith.constant 202 : index
    %c0_23 = arith.constant 0 : index
    %23 = vector.load %arg2[%c202, %c0_23] : memref<209x128xf32, #tpu.memory_space<vmem>>, vector<1x128xf32>
    %c203 = arith.constant 203 : index
    %c0_24 = arith.constant 0 : index
    %24 = vector.load %arg2[%c203, %c0_24] : memref<209x128xf32, #tpu.memory_space<vmem>>, vector<1x128xf32>
    %c204 = arith.constant 204 : index
    %c0_25 = arith.constant 0 : index
    %25 = vector.load %arg2[%c204, %c0_25] : memref<209x128xf32, #tpu.memory_space<vmem>>, vector<1x128xf32>
    %c205 = arith.constant 205 : index
    %c0_26 = arith.constant 0 : index
    %26 = vector.load %arg2[%c205, %c0_26] : memref<209x128xf32, #tpu.memory_space<vmem>>, vector<1x128xf32>
    %c206 = arith.constant 206 : index
    %c0_27 = arith.constant 0 : index
    %27 = vector.load %arg2[%c206, %c0_27] : memref<209x128xf32, #tpu.memory_space<vmem>>, vector<1x128xf32>
    %c207 = arith.constant 207 : index
    %c0_28 = arith.constant 0 : index
    %28 = vector.load %arg2[%c207, %c0_28] : memref<209x128xf32, #tpu.memory_space<vmem>>, vector<1x128xf32>
    %c208 = arith.constant 208 : index
    %c0_29 = arith.constant 0 : index
    %29 = vector.load %arg2[%c208, %c0_29] : memref<209x128xf32, #tpu.memory_space<vmem>>, vector<1x128xf32>
    %c0_i32 = arith.constant 0 : i32
    %c128_i32 = arith.constant 128 : i32
    %30 = arith.muli %c0_i32, %c128_i32 : i32
    %31 = tpu.assume_multiple %30, 128 : i32
    %c0_i32_30 = arith.constant 0 : i32
    %32 = arith.addi %31, %c0_i32_30 : i32
    %33 = tpu.assume_multiple %32, 128 : i32
    %c0_31 = arith.constant 0 : index
    %34 = arith.index_cast %33 : i32 to index
    %35 = vector.load %arg1[%c0_31, %34] : memref<3x128xf32, #tpu.memory_space<vmem>>, vector<1x128xf32>
    %36 = vector.shape_cast %35 : vector<1x128xf32> to vector<1x128xf32>
    %37 = vector.broadcast %36 : vector<1x128xf32> to vector<16x128xf32>
    %38 = arith.mulf %0, %37 : vector<16x128xf32>
    %39 = arith.addf %3, %38 : vector<16x128xf32>
    %c1 = arith.constant 1 : index
    %40 = arith.index_cast %33 : i32 to index
    %41 = vector.load %arg1[%c1, %40] : memref<3x128xf32, #tpu.memory_space<vmem>>, vector<1x128xf32>
    %42 = vector.shape_cast %41 : vector<1x128xf32> to vector<1x128xf32>
    %43 = vector.broadcast %42 : vector<1x128xf32> to vector<16x128xf32>
    %44 = arith.mulf %1, %43 : vector<16x128xf32>
    %45 = arith.addf %39, %44 : vector<16x128xf32>
    %c2 = arith.constant 2 : index
    %46 = arith.index_cast %33 : i32 to index
    %47 = vector.load %arg1[%c2, %46] : memref<3x128xf32, #tpu.memory_space<vmem>>, vector<1x128xf32>
    %48 = vector.shape_cast %47 : vector<1x128xf32> to vector<1x128xf32>
    %49 = vector.broadcast %48 : vector<1x128xf32> to vector<16x128xf32>
    %50 = arith.mulf %2, %49 : vector<16x128xf32>
    %51 = arith.addf %45, %50 : vector<16x128xf32>
    %cst = arith.constant 0.000000e+00 : f32
    %52 = vector.broadcast %cst : f32 to vector<16x128xf32>
    %53 = arith.maximumf %51, %52 : vector<16x128xf32>
    %c0_32 = arith.constant 0 : index
    %c0_33 = arith.constant 0 : index
    %54 = vector.load %arg4[%c0_32, %c0_33] : memref<16x128xf32, #tpu.memory_space<vmem>>, vector<16x128xf32>
    tpu.vector_store %arg4[%c0_32, %c0_33], %53 {strides = array<i32>} : memref<16x128xf32, #tpu.memory_space<vmem>>, vector<16x128xf32>,
    %c0_34 = arith.constant 0 : index
    %c0_35 = arith.constant 0 : index
    %55 = vector.load %arg4[%c0_34, %c0_35] : memref<16x128xf32, #tpu.memory_space<vmem>>, vector<1x128xf32>
    %56 = vector.shape_cast %55 : vector<1x128xf32> to vector<1x128xf32>
    %57 = vector.broadcast %56 : vector<1x128xf32> to vector<8x128xf32>
    %58 = arith.mulf %4, %57 : vector<8x128xf32>
    %59 = arith.addf %20, %58 : vector<8x128xf32>
    %c1_36 = arith.constant 1 : index
    %c0_37 = arith.constant 0 : index
    %60 = vector.load %arg4[%c1_36, %c0_37] : memref<16x128xf32, #tpu.memory_space<vmem>>, vector<1x128xf32>
    %61 = vector.shape_cast %60 : vector<1x128xf32> to vector<1x128xf32>
    %62 = vector.broadcast %61 : vector<1x128xf32> to vector<8x128xf32>
    %63 = arith.mulf %5, %62 : vector<8x128xf32>
    %64 = arith.addf %59, %63 : vector<8x128xf32>
    %c2_38 = arith.constant 2 : index
    %c0_39 = arith.constant 0 : index
    %65 = vector.load %arg4[%c2_38, %c0_39] : memref<16x128xf32, #tpu.memory_space<vmem>>, vector<1x128xf32>
    %66 = vector.shape_cast %65 : vector<1x128xf32> to vector<1x128xf32>
    %67 = vector.broadcast %66 : vector<1x128xf32> to vector<8x128xf32>
    %68 = arith.mulf %6, %67 : vector<8x128xf32>
    %69 = arith.addf %64, %68 : vector<8x128xf32>
    %c3 = arith.constant 3 : index
    %c0_40 = arith.constant 0 : index
    %70 = vector.load %arg4[%c3, %c0_40] : memref<16x128xf32, #tpu.memory_space<vmem>>, vector<1x128xf32>
    %71 = vector.shape_cast %70 : vector<1x128xf32> to vector<1x128xf32>
    %72 = vector.broadcast %71 : vector<1x128xf32> to vector<8x128xf32>
    %73 = arith.mulf %7, %72 : vector<8x128xf32>
    %74 = arith.addf %69, %73 : vector<8x128xf32>
    %c4 = arith.constant 4 : index
    %c0_41 = arith.constant 0 : index
    %75 = vector.load %arg4[%c4, %c0_41] : memref<16x128xf32, #tpu.memory_space<vmem>>, vector<1x128xf32>
    %76 = vector.shape_cast %75 : vector<1x128xf32> to vector<1x128xf32>
    %77 = vector.broadcast %76 : vector<1x128xf32> to vector<8x128xf32>
    %78 = arith.mulf %8, %77 : vector<8x128xf32>
    %79 = arith.addf %74, %78 : vector<8x128xf32>
    %c5 = arith.constant 5 : index
    %c0_42 = arith.constant 0 : index
    %80 = vector.load %arg4[%c5, %c0_42] : memref<16x128xf32, #tpu.memory_space<vmem>>, vector<1x128xf32>
    %81 = vector.shape_cast %80 : vector<1x128xf32> to vector<1x128xf32>
    %82 = vector.broadcast %81 : vector<1x128xf32> to vector<8x128xf32>
    %83 = arith.mulf %9, %82 : vector<8x128xf32>
    %84 = arith.addf %79, %83 : vector<8x128xf32>
    %c6 = arith.constant 6 : index
    %c0_43 = arith.constant 0 : index
    %85 = vector.load %arg4[%c6, %c0_43] : memref<16x128xf32, #tpu.memory_space<vmem>>, vector<1x128xf32>
    %86 = vector.shape_cast %85 : vector<1x128xf32> to vector<1x128xf32>
    %87 = vector.broadcast %86 : vector<1x128xf32> to vector<8x128xf32>
    %88 = arith.mulf %10, %87 : vector<8x128xf32>
    %89 = arith.addf %84, %88 : vector<8x128xf32>
    %c7 = arith.constant 7 : index
    %c0_44 = arith.constant 0 : index
    %90 = vector.load %arg4[%c7, %c0_44] : memref<16x128xf32, #tpu.memory_space<vmem>>, vector<1x128xf32>
    %91 = vector.shape_cast %90 : vector<1x128xf32> to vector<1x128xf32>
    %92 = vector.broadcast %91 : vector<1x128xf32> to vector<8x128xf32>
    %93 = arith.mulf %11, %92 : vector<8x128xf32>
    %94 = arith.addf %89, %93 : vector<8x128xf32>
    %c8 = arith.constant 8 : index
    %c0_45 = arith.constant 0 : index
    %95 = vector.load %arg4[%c8, %c0_45] : memref<16x128xf32, #tpu.memory_space<vmem>>, vector<1x128xf32>
    %96 = vector.shape_cast %95 : vector<1x128xf32> to vector<1x128xf32>
    %97 = vector.broadcast %96 : vector<1x128xf32> to vector<8x128xf32>
    %98 = arith.mulf %12, %97 : vector<8x128xf32>
    %99 = arith.addf %94, %98 : vector<8x128xf32>
    %c9 = arith.constant 9 : index
    %c0_46 = arith.constant 0 : index
    %100 = vector.load %arg4[%c9, %c0_46] : memref<16x128xf32, #tpu.memory_space<vmem>>, vector<1x128xf32>
    %101 = vector.shape_cast %100 : vector<1x128xf32> to vector<1x128xf32>
    %102 = vector.broadcast %101 : vector<1x128xf32> to vector<8x128xf32>
    %103 = arith.mulf %13, %102 : vector<8x128xf32>
    %104 = arith.addf %99, %103 : vector<8x128xf32>
    %c10 = arith.constant 10 : index
    %c0_47 = arith.constant 0 : index
    %105 = vector.load %arg4[%c10, %c0_47] : memref<16x128xf32, #tpu.memory_space<vmem>>, vector<1x128xf32>
    %106 = vector.shape_cast %105 : vector<1x128xf32> to vector<1x128xf32>
    %107 = vector.broadcast %106 : vector<1x128xf32> to vector<8x128xf32>
    %108 = arith.mulf %14, %107 : vector<8x128xf32>
    %109 = arith.addf %104, %108 : vector<8x128xf32>
    %c11 = arith.constant 11 : index
    %c0_48 = arith.constant 0 : index
    %110 = vector.load %arg4[%c11, %c0_48] : memref<16x128xf32, #tpu.memory_space<vmem>>, vector<1x128xf32>
    %111 = vector.shape_cast %110 : vector<1x128xf32> to vector<1x128xf32>
    %112 = vector.broadcast %111 : vector<1x128xf32> to vector<8x128xf32>
    %113 = arith.mulf %15, %112 : vector<8x128xf32>
    %114 = arith.addf %109, %113 : vector<8x128xf32>
    %c12 = arith.constant 12 : index
    %c0_49 = arith.constant 0 : index
    %115 = vector.load %arg4[%c12, %c0_49] : memref<16x128xf32, #tpu.memory_space<vmem>>, vector<1x128xf32>
    %116 = vector.shape_cast %115 : vector<1x128xf32> to vector<1x128xf32>
    %117 = vector.broadcast %116 : vector<1x128xf32> to vector<8x128xf32>
    %118 = arith.mulf %16, %117 : vector<8x128xf32>
    %119 = arith.addf %114, %118 : vector<8x128xf32>
    %c13 = arith.constant 13 : index
    %c0_50 = arith.constant 0 : index
    %120 = vector.load %arg4[%c13, %c0_50] : memref<16x128xf32, #tpu.memory_space<vmem>>, vector<1x128xf32>
    %121 = vector.shape_cast %120 : vector<1x128xf32> to vector<1x128xf32>
    %122 = vector.broadcast %121 : vector<1x128xf32> to vector<8x128xf32>
    %123 = arith.mulf %17, %122 : vector<8x128xf32>
    %124 = arith.addf %119, %123 : vector<8x128xf32>
    %c14 = arith.constant 14 : index
    %c0_51 = arith.constant 0 : index
    %125 = vector.load %arg4[%c14, %c0_51] : memref<16x128xf32, #tpu.memory_space<vmem>>, vector<1x128xf32>
    %126 = vector.shape_cast %125 : vector<1x128xf32> to vector<1x128xf32>
    %127 = vector.broadcast %126 : vector<1x128xf32> to vector<8x128xf32>
    %128 = arith.mulf %18, %127 : vector<8x128xf32>
    %129 = arith.addf %124, %128 : vector<8x128xf32>
    %c15 = arith.constant 15 : index
    %c0_52 = arith.constant 0 : index
    %130 = vector.load %arg4[%c15, %c0_52] : memref<16x128xf32, #tpu.memory_space<vmem>>, vector<1x128xf32>
    %131 = vector.shape_cast %130 : vector<1x128xf32> to vector<1x128xf32>
    %132 = vector.broadcast %131 : vector<1x128xf32> to vector<8x128xf32>
    %133 = arith.mulf %19, %132 : vector<8x128xf32>
    %134 = arith.addf %129, %133 : vector<8x128xf32>
    %cst_53 = arith.constant 0.000000e+00 : f32
    %135 = vector.broadcast %cst_53 : f32 to vector<8x128xf32>
    %136 = arith.maximumf %134, %135 : vector<8x128xf32>
    %c0_54 = arith.constant 0 : index
    %c0_55 = arith.constant 0 : index
    %137 = vector.load %arg5[%c0_54, %c0_55] : memref<8x128xf32, #tpu.memory_space<vmem>>, vector<8x128xf32>
    tpu.vector_store %arg5[%c0_54, %c0_55], %136 {strides = array<i32>} : memref<8x128xf32, #tpu.memory_space<vmem>>, vector<8x128xf32>,
    %c0_56 = arith.constant 0 : index
    %c0_57 = arith.constant 0 : index
    %138 = vector.load %arg5[%c0_56, %c0_57] : memref<8x128xf32, #tpu.memory_space<vmem>>, vector<1x128xf32>
    %139 = arith.mulf %21, %138 : vector<1x128xf32>
    %140 = arith.addf %29, %139 : vector<1x128xf32>
    %c1_58 = arith.constant 1 : index
    %c0_59 = arith.constant 0 : index
    %141 = vector.load %arg5[%c1_58, %c0_59] : memref<8x128xf32, #tpu.memory_space<vmem>>, vector<1x128xf32>
    %142 = arith.mulf %22, %141 : vector<1x128xf32>
    %143 = arith.addf %140, %142 : vector<1x128xf32>
    %c2_60 = arith.constant 2 : index
    %c0_61 = arith.constant 0 : index
    %144 = vector.load %arg5[%c2_60, %c0_61] : memref<8x128xf32, #tpu.memory_space<vmem>>, vector<1x128xf32>
    %145 = arith.mulf %23, %144 : vector<1x128xf32>
    %146 = arith.addf %143, %145 : vector<1x128xf32>
    %c3_62 = arith.constant 3 : index
    %c0_63 = arith.constant 0 : index
    %147 = vector.load %arg5[%c3_62, %c0_63] : memref<8x128xf32, #tpu.memory_space<vmem>>, vector<1x128xf32>
    %148 = arith.mulf %24, %147 : vector<1x128xf32>
    %149 = arith.addf %146, %148 : vector<1x128xf32>
    %c4_64 = arith.constant 4 : index
    %c0_65 = arith.constant 0 : index
    %150 = vector.load %arg5[%c4_64, %c0_65] : memref<8x128xf32, #tpu.memory_space<vmem>>, vector<1x128xf32>
    %151 = arith.mulf %25, %150 : vector<1x128xf32>
    %152 = arith.addf %149, %151 : vector<1x128xf32>
    %c5_66 = arith.constant 5 : index
    %c0_67 = arith.constant 0 : index
    %153 = vector.load %arg5[%c5_66, %c0_67] : memref<8x128xf32, #tpu.memory_space<vmem>>, vector<1x128xf32>
    %154 = arith.mulf %26, %153 : vector<1x128xf32>
    %155 = arith.addf %152, %154 : vector<1x128xf32>
    %c6_68 = arith.constant 6 : index
    %c0_69 = arith.constant 0 : index
    %156 = vector.load %arg5[%c6_68, %c0_69] : memref<8x128xf32, #tpu.memory_space<vmem>>, vector<1x128xf32>
    %157 = arith.mulf %27, %156 : vector<1x128xf32>
    %158 = arith.addf %155, %157 : vector<1x128xf32>
    %c7_70 = arith.constant 7 : index
    %c0_71 = arith.constant 0 : index
    %159 = vector.load %arg5[%c7_70, %c0_71] : memref<8x128xf32, #tpu.memory_space<vmem>>, vector<1x128xf32>
    %160 = arith.mulf %28, %159 : vector<1x128xf32>
    %161 = arith.addf %158, %160 : vector<1x128xf32>
    %c0_72 = arith.constant 0 : index
    %162 = arith.index_cast %33 : i32 to index
    %163 = vector.load %arg3[%c0_72, %162] : memref<1x128xf32, #tpu.memory_space<vmem>>, vector<1x128xf32>
    tpu.vector_store %arg3[%c0_72, %162], %161 {strides = array<i32>} : memref<1x128xf32, #tpu.memory_space<vmem>>, vector<1x128xf32>,
    %c1_i32 = arith.constant 1 : i32
    return
  }
  func.func @transform_0(%arg0: i32) -> (i32, i32) {
    %c0_i32 = arith.constant 0 : i32
    %c0_i32_0 = arith.constant 0 : i32
    return %c0_i32, %arg0 : i32, i32
  }
  func.func @transform_1(%arg0: i32) -> (i32, i32) {
    %c0_i32 = arith.constant 0 : i32
    %c0_i32_0 = arith.constant 0 : i32
    %c0_i32_1 = arith.constant 0 : i32
    return %c0_i32, %c0_i32_0 : i32, i32
  }
  func.func @transform_2(%arg0: i32) -> (i32, i32) {
    %c0_i32 = arith.constant 0 : i32
    %c0_i32_0 = arith.constant 0 : i32
    return %c0_i32, %arg0 : i32, i32
  }
}

</mosaic_0001>

<llo_original>
// kernel: qos_model_forward.1
$region0: #{qos_model_forward.1}
  #allocation0 [shape = 'u32[]', space=smem, size = 0x4, offset = 0x4, fixed_abs, tag = 'smem constant byte address 0x4 - core index']
  #allocation1 [shape = 'u32[144,128]{1,0:T(1,128)}', space=vmem, size = 0x12000, scoped, tag = 'internal scratch']
  #allocation2 [shape = 'f32[16,128]{1,0:T(8,128)}', space=vmem, size = 0x2000, scoped, tag = 'scratch operand']
  #allocation3 [shape = 'f32[8,128]{1,0:T(8,128)}', space=vmem, size = 0x1000, scoped, tag = 'scratch operand']
  %s0 = inlined_call_operand.hbm [shape: f32[3,500], index: 0, kind: input, shape index: {}]
  %s1 = inlined_call_operand.hbm [shape: f32[209,128], index: 1, kind: input, shape index: {}]
  %s2 = inlined_call_operand.hbm [shape: f32[1,500], index: 2, kind: output, shape index: {}]
  %s3 = sld [smem:[#allocation0]]
  $region49: #{qos_model_forward.1} parent=0
    _
  %s5 = ssub.s32 1, %s3
  %s6 = scalar_select 0, %s5, %s3
  $region1: #{qos_model_forward.1} parent=0
    #allocation4 [shape = 'u8[4096]{0}', space=vmem, size = 0x1000, scoped, tag = 'input window, operand 0']
    #allocation5 [shape = 's32[2]{0}', space=sflag, size = 0x8, scoped, tag = 'scoped memory for qos_model_forward.1']
    #allocation6 [shape = 's32[2]{0}', space=sflag, size = 0x8, scoped, tag = 'scoped memory for qos_model_forward.1']
    #allocation7 [shape = 'u8[110592]{0}', space=vmem, size = 0x1b000, scoped, tag = 'input window, operand 1, single buffered']
    #allocation8 [shape = 's32[1]{0}', space=sflag, size = 0x4, scoped, tag = 'scoped memory for qos_model_forward.1']
    #allocation9 [shape = 'u8[1024]{0}', space=vmem, size = 0x400, scoped, tag = 'output window, operand 0']
    %7 = vsyncpa [#allocation5], 0
    %s8 = scalar_lea.sflag [#allocation5], 1
    %9 = vsyncpa %s8, 0
    %10 = vsyncpa [#allocation8], 0
    %11 = vsyncpa [#allocation6], 0
    %s12 = scalar_lea.sflag [#allocation6], 1
    %13 = vsyncpa %s12, 0
    loop: start=0, step=1, limit=6
    $region2: #{qos_model_forward.1} parent=1 // loop_pre_header
      _
    $region3: #{qos_model_forward.1} parent=1 // loop_header
      %s15 = sphi 0, %s19
      %p16 = scmp.ge.s32.totalorder %s15, 6
      %s25 = sphi 0, %s27
      %s28 = sphi 0, %s25
      %s29 = sphi 0, %s28
      %s45 = sphi 0, %s29
      %s49 = sphi 0, %s49
      %s51 = sphi 0, %s49
      %s52 = sphi 0, %s51
      %s66 = sphi 0, %s52
      %s72 = sphi 0, %s74
      %s75 = sphi 0, %s72
      %s76 = sphi 0, %s75
      %s92 = sphi 0, %s76
    $region4: #{qos_model_forward.1} parent=1 // loop_header_branch
      %18 = sbr.rel (%p16) target = $region8
    $region5: #{qos_model_forward.1} parent=1 // loop_body
      %s20 = ssub.s32 %s15, 1
      %s21 = ssub.s32 %s15, 2
      %s22 = sadd.s32 %s15, 1
      %s23 = ssub.s32 %s15, %s22
      %p24 = scmp.eq.s32.totalorder %s23, 0
      %s26 = sadd.s32 %s25, 1
      %s27 = scalar_select %p24, %s25, %s26
      %p30 = pneg %p24
      %p31 = scmp.eq.s32.totalorder %s15, 3
      %p32 = por %p30, %p31
      %p33 = scmp.ne.s32.totalorder %s25, %s28
      %p34 = scmp.eq.s32.totalorder %s15, 0
      %p35 = por %p33, %p34
      %p36 = scmp.ne.s32.totalorder %s25, %s28
      %p37 = scmp.eq.s32.totalorder %s20, 3
      %p38 = por %p36, %p37
      %p39 = scmp.ne.s32.totalorder %s28, %s29
      %p40 = scmp.eq.s32.totalorder %s20, 0
      %p41 = por %p39, %p40
      %p42 = scmp.ne.s32.totalorder %s28, %s29
      %p43 = scmp.eq.s32.totalorder %s21, 3
      %p44 = por %p42, %p43
      %p46 = scmp.ne.s32.totalorder %s29, %s45
      %p47 = scmp.eq.s32.totalorder %s21, 0
      %p48 = por %p46, %p47
      %s50 = sadd.s32 %s49, 1
      %p53 = scmp.eq.s32.totalorder %s15, 3
      %p54 = scmp.ne.s32.totalorder %s49, %s51
      %p55 = scmp.eq.s32.totalorder %s15, 0
      %p56 = por %p54, %p55
      %p57 = scmp.ne.s32.totalorder %s49, %s51
      %p58 = scmp.eq.s32.totalorder %s20, 3
      %p59 = por %p57, %p58
      %p60 = scmp.ne.s32.totalorder %s51, %s52
      %p61 = scmp.eq.s32.totalorder %s20, 0
      %p62 = por %p60, %p61
      %p63 = scmp.ne.s32.totalorder %s51, %s52
      %p64 = scmp.eq.s32.totalorder %s21, 3
      %p65 = por %p63, %p64
      %p67 = scmp.ne.s32.totalorder %s52, %s66
      %p68 = scmp.eq.s32.totalorder %s21, 0
      %p69 = por %p67, %p68
      %s70 = ssub.s32 %s15, %s22
      %p71 = scmp.eq.s32.totalorder %s70, 0
      %s73 = sadd.s32 %s72, 1
      %s74 = scalar_select %p71, %s72, %s73
      %p77 = pneg %p71
      %p78 = scmp.eq.s32.totalorder %s15, 3
      %p79 = por %p77, %p78
      %p80 = scmp.ne.s32.totalorder %s72, %s75
      %p81 = scmp.eq.s32.totalorder %s15, 0
      %p82 = por %p80, %p81
      %p83 = scmp.ne.s32.totalorder %s72, %s75
      %p84 = scmp.eq.s32.totalorder %s20, 3
      %p85 = por %p83, %p84
      %p86 = scmp.ne.s32.totalorder %s75, %s76
      %p87 = scmp.eq.s32.totalorder %s20, 0
      %p88 = por %p86, %p87
      %p89 = scmp.ne.s32.totalorder %s75, %s76
      %p90 = scmp.eq.s32.totalorder %s21, 3
      %p91 = por %p89, %p90
      %p93 = scmp.ne.s32.totalorder %s76, %s92
      %p94 = scmp.eq.s32.totalorder %s21, 0
      %p95 = por %p93, %p94
      %p96 = scmp.le.s32.totalorder 1, %s15
      %p97 = scmp.lt.s32.totalorder %s15, 5
      %p98 = pnand %p96, %p97
      %p99 = pneg %p98
      // Predicated region
      $region9: #{qos_model_forward.1} parent=5 // pred_check
        _
      $region10: #{qos_model_forward.1} parent=5 // pred_check_branch
        %101 = sbr.rel (%p98) target = $region12
      $region11: #{qos_model_forward.1} parent=5 // pred_region
        %s102 = ssub.s32 %s15, 1
        // Predicated region
        $region13: #{qos_model_forward.1} parent=11 // pred_check
          %p103 = pneg %p62
        $region14: #{qos_model_forward.1} parent=11 // pred_check_branch
          %105 = sbr.rel (%p103) target = $region16
        $region15: #{qos_model_forward.1} parent=11 // pred_region
          %s107 = ssub.s32 3456, 3456
          %108 = vsyncadd [#allocation8], %s107
          %s109 = sshll.u32 [#allocation7], 4
          %s110 = int_to_ptr.vmem [resolvable:$true] %s109
          %115 = dma.hbm_to_vmem [thread:$0]  %s1, 3456, %s110, [#allocation8], 128, 128, 8
        $region16: #{qos_model_forward.1} parent=11 // pred_fallthru
          _
      $region12: #{qos_model_forward.1} parent=5 // pred_fallthru
        _
      %p116 = scmp.lt.s32.totalorder %s15, 4
      // Predicated region
      $region17: #{qos_model_forward.1} parent=5 // pred_check
        %p117 = pneg %p116
      $region18: #{qos_model_forward.1} parent=5 // pred_check_branch
        %119 = sbr.rel (%p117) target = $region20
      $region19: #{qos_model_forward.1} parent=5 // pred_region
        // Predicated region
        $region21: #{qos_model_forward.1} parent=19 // pred_check
          %p120 = pneg %p35
        $region22: #{qos_model_forward.1} parent=19 // pred_check_branch
          %122 = sbr.rel (%p120) target = $region24
        $region23: #{qos_model_forward.1} parent=19 // pred_region
          %s123 = sand.u32 %s25, 1
          %s124 = scalar_lea.sflag [#allocation5], %s123
          %s125 = sand.u32 %s25, 1
          %s126 = smul.addr %s125, 4
          %s127 = scalar_lea.vmem [#allocation4], %s126
          %s129 = ssub.s32 64, 64
          %130 = vsyncadd %s124, %s129
          %s131 = smul.addr %s15, 64
          %s132 = scalar_lea.hbm %s0, %s131
          %s134 = sshll.u32 %s127, 4
          %s135 = int_to_ptr.vmem [resolvable:$true] %s134
          %137 = dma.hbm_to_vmem [thread:$0]  %s132, 64, %s135, %s124
        $region24: #{qos_model_forward.1} parent=19 // pred_fallthru
          _
      $region20: #{qos_model_forward.1} parent=5 // pred_fallthru
        _
      %p138 = scmp.le.s32.totalorder 1, %s15
      %p139 = scmp.lt.s32.totalorder %s15, 5
      %p140 = pnand %p138, %p139
      %p141 = pneg %p140
      // Predicated region
      $region25: #{qos_model_forward.1} parent=5 // pred_check
        _
      $region26: #{qos_model_forward.1} parent=5 // pred_check_branch
        %143 = sbr.rel (%p140) target = $region28
      $region27: #{qos_model_forward.1} parent=5 // pred_region
        %s144 = ssub.s32 %s15, 1
        %s145 = sand.u32 %s28, 1
        %s146 = scalar_lea.sflag [#allocation5], %s145
        %s147 = sand.u32 %s28, 1
        %s148 = smul.addr %s147, 4
        %s149 = scalar_lea.vmem [#allocation4], %s148
        // Predicated region
        $region29: #{qos_model_forward.1} parent=27 // pred_check
          %p150 = pneg %p41
        $region30: #{qos_model_forward.1} parent=27 // pred_check_branch
          %152 = sbr.rel (%p150) target = $region32
        $region31: #{qos_model_forward.1} parent=27 // pred_region
          %153 = dma.done %s146, 64
        $region32: #{qos_model_forward.1} parent=27 // pred_fallthru
          _
        // Predicated region
        $region33: #{qos_model_forward.1} parent=27 // pred_check
          %p154 = pneg %p62
        $region34: #{qos_model_forward.1} parent=27 // pred_check_branch
          %156 = sbr.rel (%p154) target = $region36
        $region35: #{qos_model_forward.1} parent=27 // pred_region
          %157 = dma.done [#allocation8], 3456
        $region36: #{qos_model_forward.1} parent=27 // pred_fallthru
          _
        %s158 = sand.u32 %s28, 1
        %s159 = scalar_lea.sflag [#allocation5], %s158
        %s160 = sand.u32 %s28, 1
        %s161 = smul.addr %s160, 4
        %s162 = scalar_lea.vmem [#allocation4], %s161
        %p163 = pneg %p41
        %p164 = pneg %p38
        %p165 = pneg %p62
        %p166 = pneg %p59
        %p167 = pneg %p88
        %p168 = pneg %p85
        %s169 = sand.u32 %s75, 1
        %s170 = scalar_lea.sflag [#allocation6], %s169
        %s171 = sand.u32 %s75, 1
        %s172 = scalar_lea.vmem [#allocation9], %s171
        %v173 = vld [vmem:[#allocation7] sm:$0xff]
        %v174 = vld [vmem:[#allocation7 + $0x8] sm:$0xff]
        %v175 = vld [vmem:[#allocation7 + $0x10] sm:$0xff]
        %v176 = vld [vmem:[#allocation7 + $0x18] sm:$0xff]
        %v177 = vld [vmem:[#allocation7 + $0x20] sm:$0xff]
        %v178 = vld [vmem:[#allocation7 + $0x28] sm:$0xff]
        %v179 = vld [vmem:[#allocation7 + $0x30] sm:$0xff]
        %v180 = vld [vmem:[#allocation7 + $0x38] sm:$0xff]
        %v181 = vld [vmem:[#allocation7 + $0x40] sm:$0xff]
        %v182 = vld [vmem:[#allocation7 + $0x48] sm:$0xff]
        %v183 = vld [vmem:[#allocation7 + $0x50] sm:$0xff]
        %v184 = vld [vmem:[#allocation7 + $0x58] sm:$0xff]
        %v185 = vld [vmem:[#allocation7 + $0x60] sm:$0xff]
        %v186 = vld [vmem:[#allocation7 + $0x68] sm:$0xff]
        %v187 = vld [vmem:[#allocation7 + $0x70] sm:$0xff]
        %v188 = vld [vmem:[#allocation7 + $0x78] sm:$0xff]
        %v189 = vld [vmem:[#allocation7 + $0x80] sm:$0xff]
        %v190 = vld [vmem:[#allocation7 + $0x88] sm:$0xff]
        %v191 = vld [vmem:[#allocation7 + $0x90] sm:$0xff]
        %v192 = vld [vmem:[#allocation7 + $0x98] sm:$0xff]
        %v193 = vld [vmem:[#allocation7 + $0xa0] sm:$0xff]
        %v194 = vld [vmem:[#allocation7 + $0xa8] sm:$0xff]
        %v195 = vld [vmem:[#allocation7 + $0xb0] sm:$0xff]
        %v196 = vld [vmem:[#allocation7 + $0xb8] sm:$0xff]
        %v197 = vld [vmem:[#allocation7 + $0xc0] sm:$0xff]
        %v198 = vld [vmem:[#allocation7 + $0xc8] sm:$0x1]
        %v199 = vld [vmem:[#allocation7 + $0xc9] sm:$0x1]
        %v200 = vld [vmem:[#allocation7 + $0xca] sm:$0x1]
        %v201 = vld [vmem:[#allocation7 + $0xcb] sm:$0x1]
        %v202 = vld [vmem:[#allocation7 + $0xcc] sm:$0x1]
        %v203 = vld [vmem:[#allocation7 + $0xcd] sm:$0x1]
        %v204 = vld [vmem:[#allocation7 + $0xce] sm:$0x1]
        %v205 = vld [vmem:[#allocation7 + $0xcf] sm:$0x1]
        %v206 = vld [vmem:[#allocation7 + $0xd0] sm:$0x1]
        %v207 = vld [vmem:[%s149] sm:$0x1]
        %v208 = vlaneseq
        %v209 = vshrl.u32 %v208, 7
        %v210 = vsub.s32 0, %v209
        %v211 = vrot.slane %v207, %v210
        %v212 = vmul.f32 %v173, %v211
        %v213 = vmul.f32 %v174, %v211
        %v214 = vadd.f32 %v179, %v212
        %v215 = vadd.f32 %v180, %v213
        %v216 = vld [vmem:[%s149 + $0x1] sm:$0x1]
        %v217 = vlaneseq
        %v218 = vshrl.u32 %v217, 7
        %v219 = vsub.s32 0, %v218
        %v220 = vrot.slane %v216, %v219
        %v221 = vmul.f32 %v175, %v220
        %v222 = vmul.f32 %v176, %v220
        %v223 = vadd.f32 %v214, %v221
        %v224 = vadd.f32 %v215, %v222
        %v225 = vld [vmem:[%s149 + $0x2] sm:$0x1]
        %v226 = vlaneseq
        %v227 = vshrl.u32 %v226, 7
        %v228 = vsub.s32 0, %v227
        %v229 = vrot.slane %v225, %v228
        %v230 = vmul.f32 %v177, %v229
        %v231 = vmul.f32 %v178, %v229
        %v232 = vadd.f32 %v223, %v230
        %v233 = vadd.f32 %v224, %v231
        %v234 = vmax.f32 %v232, 0.0
        %v235 = vmax.f32 %v233, 0.0
        %236 = vst [vmem:[#allocation2] sm:$0xff] %v234
        %237 = vst [vmem:[#allocation2 + $0x8] sm:$0xff] %v235
        %v238 = vld [vmem:[#allocation2] sm:$0x1]
        %v239 = vlaneseq
        %v240 = vshrl.u32 %v239, 7
        %v241 = vsub.s32 0, %v240
        %v242 = vrot.slane %v238, %v241
        %v243 = vmul.f32 %v181, %v242
        %v244 = vadd.f32 %v197, %v243
        %v245 = vld [vmem:[#allocation2 + $0x1] sm:$0x1]
        %v246 = vlaneseq
        %v247 = vshrl.u32 %v246, 7
        %v248 = vsub.s32 0, %v247
        %v249 = vrot.slane %v245, %v248
        %v250 = vmul.f32 %v182, %v249
        %v251 = vadd.f32 %v244, %v250
        %v252 = vld [vmem:[#allocation2 + $0x2] sm:$0x1]
        %v253 = vlaneseq
        %v254 = vshrl.u32 %v253, 7
        %v255 = vsub.s32 0, %v254
        %v256 = vrot.slane %v252, %v255
        %v257 = vmul.f32 %v183, %v256
        %v258 = vadd.f32 %v251, %v257
        %v259 = vld [vmem:[#allocation2 + $0x3] sm:$0x1]
        %v260 = vlaneseq
        %v261 = vshrl.u32 %v260, 7
        %v262 = vsub.s32 0, %v261
        %v263 = vrot.slane %v259, %v262
        %v264 = vmul.f32 %v184, %v263
        %v265 = vadd.f32 %v258, %v264
        %v266 = vld [vmem:[#allocation2 + $0x4] sm:$0x1]
        %v267 = vlaneseq
        %v268 = vshrl.u32 %v267, 7
        %v269 = vsub.s32 0, %v268
        %v270 = vrot.slane %v266, %v269
        %v271 = vmul.f32 %v185, %v270
        %v272 = vadd.f32 %v265, %v271
        %v273 = vld [vmem:[#allocation2 + $0x5] sm:$0x1]
        %v274 = vlaneseq
        %v275 = vshrl.u32 %v274, 7
        %v276 = vsub.s32 0, %v275
        %v277 = vrot.slane %v273, %v276
        %v278 = vmul.f32 %v186, %v277
        %v279 = vadd.f32 %v272, %v278
        %v280 = vld [vmem:[#allocation2 + $0x6] sm:$0x1]
        %v281 = vlaneseq
        %v282 = vshrl.u32 %v281, 7
        %v283 = vsub.s32 0, %v282
        %v284 = vrot.slane %v280, %v283
        %v285 = vmul.f32 %v187, %v284
        %v286 = vadd.f32 %v279, %v285
        %v287 = vld [vmem:[#allocation2 + $0x7] sm:$0x1]
        %v288 = vlaneseq
        %v289 = vshrl.u32 %v288, 7
        %v290 = vsub.s32 0, %v289
        %v291 = vrot.slane %v287, %v290
        %v292 = vmul.f32 %v188, %v291
        %v293 = vadd.f32 %v286, %v292
        %v294 = vld [vmem:[#allocation2 + $0x8] sm:$0x1]
        %v295 = vlaneseq
        %v296 = vshrl.u32 %v295, 7
        %v297 = vsub.s32 0, %v296
        %v298 = vrot.slane %v294, %v297
        %v299 = vmul.f32 %v189, %v298
        %v300 = vadd.f32 %v293, %v299
        %v301 = vld [vmem:[#allocation2 + $0x9] sm:$0x1]
        %v302 = vlaneseq
        %v303 = vshrl.u32 %v302, 7
        %v304 = vsub.s32 0, %v303
        %v305 = vrot.slane %v301, %v304
        %v306 = vmul.f32 %v190, %v305
        %v307 = vadd.f32 %v300, %v306
        %v308 = vld [vmem:[#allocation2 + $0xa] sm:$0x1]
        %v309 = vlaneseq
        %v310 = vshrl.u32 %v309, 7
        %v311 = vsub.s32 0, %v310
        %v312 = vrot.slane %v308, %v311
        %v313 = vmul.f32 %v191, %v312
        %v314 = vadd.f32 %v307, %v313
        %v315 = vld [vmem:[#allocation2 + $0xb] sm:$0x1]
        %v316 = vlaneseq
        %v317 = vshrl.u32 %v316, 7
        %v318 = vsub.s32 0, %v317
        %v319 = vrot.slane %v315, %v318
        %v320 = vmul.f32 %v192, %v319
        %v321 = vadd.f32 %v314, %v320
        %v322 = vld [vmem:[#allocation2 + $0xc] sm:$0x1]
        %v323 = vlaneseq
        %v324 = vshrl.u32 %v323, 7
        %v325 = vsub.s32 0, %v324
        %v326 = vrot.slane %v322, %v325
        %v327 = vmul.f32 %v193, %v326
        %v328 = vadd.f32 %v321, %v327
        %v329 = vld [vmem:[#allocation2 + $0xd] sm:$0x1]
        %v330 = vlaneseq
        %v331 = vshrl.u32 %v330, 7
        %v332 = vsub.s32 0, %v331
        %v333 = vrot.slane %v329, %v332
        %v334 = vmul.f32 %v194, %v333
        %v335 = vadd.f32 %v328, %v334
        %v336 = vld [vmem:[#allocation2 + $0xe] sm:$0x1]
        %v337 = vlaneseq
        %v338 = vshrl.u32 %v337, 7
        %v339 = vsub.s32 0, %v338
        %v340 = vrot.slane %v336, %v339
        %v341 = vmul.f32 %v195, %v340
        %v342 = vadd.f32 %v335, %v341
        %v343 = vld [vmem:[#allocation2 + $0xf] sm:$0x1]
        %v344 = vlaneseq
        %v345 = vshrl.u32 %v344, 7
        %v346 = vsub.s32 0, %v345
        %v347 = vrot.slane %v343, %v346
        %v348 = vmul.f32 %v196, %v347
        %v349 = vadd.f32 %v342, %v348
        %v350 = vmax.f32 %v349, 0.0
        %351 = vst [vmem:[#allocation3] sm:$0xff] %v350
        %v352 = vld [vmem:[#allocation3] sm:$0x1]
        %v353 = vmul.f32 %v198, %v352
        %v354 = vadd.f32 %v206, %v353
        %v355 = vld [vmem:[#allocation3 + $0x1] sm:$0x1]
        %v356 = vmul.f32 %v199, %v355
        %v357 = vadd.f32 %v354, %v356
        %v358 = vld [vmem:[#allocation3 + $0x2] sm:$0x1]
        %v359 = vmul.f32 %v200, %v358
        %v360 = vadd.f32 %v357, %v359
        %v361 = vld [vmem:[#allocation3 + $0x3] sm:$0x1]
        %v362 = vmul.f32 %v201, %v361
        %v363 = vadd.f32 %v360, %v362
        %v364 = vld [vmem:[#allocation3 + $0x4] sm:$0x1]
        %v365 = vmul.f32 %v202, %v364
        %v366 = vadd.f32 %v363, %v365
        %v367 = vld [vmem:[#allocation3 + $0x5] sm:$0x1]
        %v368 = vmul.f32 %v203, %v367
        %v369 = vadd.f32 %v366, %v368
        %v370 = vld [vmem:[#allocation3 + $0x6] sm:$0x1]
        %v371 = vmul.f32 %v204, %v370
        %v372 = vadd.f32 %v369, %v371
        %v373 = vld [vmem:[#allocation3 + $0x7] sm:$0x1]
        %v374 = vmul.f32 %v205, %v373
        %v375 = vadd.f32 %v372, %v374
        %376 = vst [vmem:[%s172] sm:$0x1] %v375
        %s377 = sand.u32 %s75, 1
        %s378 = scalar_lea.sflag [#allocation6], %s377
        %s379 = sand.u32 %s75, 1
        %s380 = scalar_lea.vmem [#allocation9], %s379
        // Predicated region
        $region37: #{qos_model_forward.1} parent=27 // pred_check
          %p381 = pneg %p85
        $region38: #{qos_model_forward.1} parent=27 // pred_check_branch
          %383 = sbr.rel (%p381) target = $region40
        $region39: #{qos_model_forward.1} parent=27 // pred_region
          %s385 = ssub.s32 16, 16
          %386 = vsyncadd %s378, %s385
          %s387 = smul.addr %s20, 16
          %s388 = scalar_lea.hbm %s2, %s387
          %s390 = sshll.u32 %s380, 4
          %s391 = int_to_ptr.vmem [resolvable:$true] %s390
          %393 = dma.vmem_to_hbm [thread:$0]  %s391, 16, %s388, %s378
        $region40: #{qos_model_forward.1} parent=27 // pred_fallthru
          _
      $region28: #{qos_model_forward.1} parent=5 // pred_fallthru
        _
      %p394 = scmp.le.s32.totalorder 2, %s15
      // Predicated region
      $region41: #{qos_model_forward.1} parent=5 // pred_check
        %p395 = pneg %p394
      $region42: #{qos_model_forward.1} parent=5 // pred_check_branch
        %397 = sbr.rel (%p395) target = $region44
      $region43: #{qos_model_forward.1} parent=5 // pred_region
        %s398 = ssub.s32 %s15, 2
        // Predicated region
        $region45: #{qos_model_forward.1} parent=43 // pred_check
          %p399 = pneg %p91
        $region46: #{qos_model_forward.1} parent=43 // pred_check_branch
          %401 = sbr.rel (%p399) target = $region48
        $region47: #{qos_model_forward.1} parent=43 // pred_region
          %s402 = sand.u32 %s76, 1
          %s403 = scalar_lea.sflag [#allocation6], %s402
          %s404 = sand.u32 %s76, 1
          %s405 = scalar_lea.vmem [#allocation9], %s404
          %406 = dma.done %s403, 16
        $region48: #{qos_model_forward.1} parent=43 // pred_fallthru
          _
      $region44: #{qos_model_forward.1} parent=5 // pred_fallthru
        _
    $region6: #{qos_model_forward.1} parent=1 // loop_footer
      %s19 = sadd.s32 1, %s15
    $region7: #{qos_model_forward.1} parent=1 // loop_footer_branch
      %14 = sbr.rel target = $region3
    $region8: #{qos_model_forward.1} parent=1 // loop_exit
      _
    %407 = vsyncpa [#allocation5], 1
    %s408 = scalar_lea.sflag [#allocation5], 1
    %409 = vsyncpa %s408, 1
    %410 = vsyncpa [#allocation8], 1
    %411 = vsyncpa [#allocation6], 1
    %s412 = scalar_lea.sflag [#allocation6], 1
    %413 = vsyncpa %s412, 1

</llo_original>
